<compile_context>
chip_gen: v7x
topology: tpu7x:2x2x1
jax: 0.10.0
libtpu: 0.0.40
codegen_flags: <defaults>
</compile_context>

<pallas_src>
import jax
import jax.numpy as jnp
from jax.experimental import pallas as pl
from jax.experimental.pallas import tpu as pltpu

LANES = 128


def round_up(x, m):
    return (x + m - 1) // m * m


def _choose_tile(n_pad):
    # Largest of {512, 256, 128} that divides the padded node count.
    for t in (512, 256, 128):
        if n_pad % t == 0:
            return t
    return 128  # unreachable: n_pad is always a multiple of 128


# ----------------------- Kernel 1: feature transform ------------------------

def xw_kernel(x_ref, w_ref, xw_ref):
    # x_ref: [tm, Dp] f32, w_ref: [Dp, Dp] f32 -> xw_ref: [tm, Dp] bf16
    xw_ref[...] = jnp.dot(
        x_ref[...], w_ref[...], preferred_element_type=jnp.float32
    ).astype(xw_ref.dtype)


def feature_transform(x, w, *, tm):
    n_pad, d_pad = x.shape
    grid = (n_pad // tm,)
    return pl.pallas_call(
        xw_kernel,
        out_shape=jax.ShapeDtypeStruct((n_pad, d_pad), jnp.bfloat16),
        grid_spec=pltpu.PrefetchScalarGridSpec(
            num_scalar_prefetch=0,
            grid=grid,
            in_specs=[
                pl.BlockSpec((tm, d_pad), lambda i: (i, 0)),
                pl.BlockSpec((d_pad, d_pad), lambda i: (0, 0)),
            ],
            out_specs=pl.BlockSpec((tm, d_pad), lambda i: (i, 0)),
        ),
        compiler_params=pltpu.CompilerParams(
            dimension_semantics=("parallel",),
        ),
        cost_estimate=pl.CostEstimate(
            flops=2 * n_pad * d_pad * d_pad,
            transcendentals=0,
            bytes_accessed=n_pad * d_pad * 4 + d_pad * d_pad * 4 + n_pad * d_pad * 2,
        ),
    )(x, w)


# ------------------- Kernel 2: tiled propagation + relu ---------------------

def propagate_kernel(a_ref, xw_ref, b_ref, o_ref, acc_ref):
    # a_ref:  [tm, tk] bf16   (A_norm tile)
    # xw_ref: [tk, Dp] bf16   (transformed features tile)
    # b_ref:  [1,  Dp] f32    (bias)
    # o_ref:  [tm, Dp] f32    (output tile, resident across the k axis)
    # acc_ref:[tm, Dp] f32    (VMEM accumulator scratch)
    k = pl.program_id(1)

    @pl.when(k == 0)
    def _():
        acc_ref[...] = jnp.zeros_like(acc_ref)

    acc_ref[...] += jnp.dot(
        a_ref[...], xw_ref[...], preferred_element_type=jnp.float32
    )

    @pl.when(k == pl.num_programs(1) - 1)
    def _():
        o_ref[...] = jnp.maximum(acc_ref[...] + b_ref[...], 0.0)


def propagate(a_norm_bf16, xw_bf16, b_pad, *, tm, tk):
    n_pad, d_pad = xw_bf16.shape
    grid = (n_pad // tm, n_pad // tk)
    bytes_accessed = (
        n_pad * n_pad * 2                    # A_norm (bf16), read once
        + grid[0] * n_pad * d_pad * 2        # XW re-streamed per row stripe (bf16)
        + n_pad * d_pad * 4                  # output (f32)
    )
    return pl.pallas_call(
        propagate_kernel,
        out_shape=jax.ShapeDtypeStruct((n_pad, d_pad), jnp.float32),
        grid_spec=pltpu.PrefetchScalarGridSpec(
            num_scalar_prefetch=0,
            grid=grid,
            in_specs=[
                pl.BlockSpec((tm, tk), lambda i, k: (i, k)),       # A tile
                pl.BlockSpec((tk, d_pad), lambda i, k: (k, 0)),    # XW tile
                pl.BlockSpec((1, d_pad), lambda i, k: (0, 0)),     # bias
            ],
            out_specs=pl.BlockSpec((tm, d_pad), lambda i, k: (i, 0)),
            scratch_shapes=[pltpu.VMEM((tm, d_pad), jnp.float32)],
        ),
        compiler_params=pltpu.CompilerParams(
            dimension_semantics=("parallel", "arbitrary"),
            vmem_limit_bytes=48 * 1024 * 1024,  # safe on v7x (64 MiB) and v5e/v6e
        ),
        cost_estimate=pl.CostEstimate(
            flops=2 * n_pad * n_pad * d_pad,
            transcendentals=0,
            bytes_accessed=bytes_accessed,
        ),
    )(a_norm_bf16, xw_bf16, b_pad)


# ------------------------------ Model glue ----------------------------------

def build_normalized_adjacency(edge_index, num_nodes):
    """Dense PyG-faithful gcn_norm: transpose-scatter-add of edge weights,
    add_remaining_self_loops, symmetric in-degree normalization."""
    src, dst = edge_index[0], edge_index[1]
    # Keep duplicate edges (scatter-add); drop explicit self-loops, then add
    # exactly one self-loop per node (add_remaining_self_loops semantics).
    w = jnp.where(src == dst, 0.0, 1.0).astype(jnp.float32)
    a_t = jnp.zeros((num_nodes, num_nodes), jnp.float32).at[dst, src].add(w)
    a_t = a_t + jnp.eye(num_nodes, dtype=jnp.float32)
    deg = a_t.sum(axis=1)  # in-degree (incl. self-loop)
    d_inv_sqrt = jnp.where(deg > 0, jax.lax.rsqrt(deg), 0.0)
    return d_inv_sqrt[:, None] * a_t * d_inv_sqrt[None, :]


def xavier_uniform(key, shape):
    fan_in, fan_out = shape[1], shape[0]
    bound = (6.0 / (fan_in + fan_out)) ** 0.5
    return jax.random.uniform(key, shape, jnp.float32, -bound, bound)


def init_params(key, num_nodes, embedding_size, num_layers):
    keys = jax.random.split(key, num_layers + 1)
    # nn.init.xavier_uniform_(embedding.weight)
    emb = xavier_uniform(keys[0], (num_nodes, embedding_size))
    convs = []
    for l in range(num_layers):
        w = xavier_uniform(keys[l + 1], (embedding_size, embedding_size))
        b = jnp.zeros((embedding_size,), dtype=jnp.float32)
        convs.append((w, b))
    return emb, convs


def gcn_forward(emb, convs, edge_index, num_nodes):
    N, D = emb.shape
    n_pad = round_up(num_nodes, LANES)
    d_pad = round_up(D, LANES)
    tile = _choose_tile(n_pad)

    a_norm = build_normalized_adjacency(edge_index, num_nodes)
    a_pad = jnp.zeros((n_pad, n_pad), jnp.float32).at[:N, :N].set(a_norm)
    a_bf16 = a_pad.astype(jnp.bfloat16)

    # Lane-pad features; padded rows/cols stay isolated because A / W padding is 0.
    x = jnp.zeros((n_pad, d_pad), jnp.float32).at[:N, :D].set(emb)
    # (accessing embedding.weight directly bypasses max_norm renorm, as in the spec)

    for (w, b) in convs:
        w_pad = jnp.zeros((d_pad, d_pad), jnp.float32).at[:D, :D].set(w)
        b_pad = jnp.zeros((1, d_pad), jnp.float32).at[0, :D].set(b)
        xw = feature_transform(x, w_pad, tm=tile)          # X @ W once per layer
        x = propagate(a_bf16, xw, b_pad, tm=tile, tk=tile)  # relu(A_norm @ XW + b)
        # dropout: eval-mode identity  # TODO(synk): training-mode dropout not reproduced

    return x[:num_nodes, :D]


# -------------------------------- Main ---------------------------------------

if __name__ == "__main__":
    num_nodes = 64
    embedding_size = 32
    num_layers = 2
    num_edges = 128

    key = jax.random.PRNGKey(0)
    k_params, k_edges = jax.random.split(key)

    emb, convs = init_params(k_params, num_nodes, embedding_size, num_layers)

    # Random (src, dst) edge index, shape [2, E], int32
    edge_index = jax.random.randint(
        k_edges, (2, num_edges), minval=0, maxval=num_nodes, dtype=jnp.int32
    )

    out = gcn_forward(emb, convs, edge_index, num_nodes)
    out = jax.block_until_ready(out)

    assert out.shape == (num_nodes, embedding_size)
    assert out.dtype == jnp.float32
    print("KERNEL_OK")
</pallas_src>

<mosaic_0001>
module attributes {stable_mosaic.version = 11 : i64} {
  func.func @xw_kernel(%arg0: i32, %arg1: memref<128x128xf32, #tpu.memory_space<vmem>>, %arg2: memref<128x128xf32, #tpu.memory_space<vmem>>, %arg3: memref<128x128xbf16, #tpu.memory_space<vmem>>) attributes {dimension_semantics = [#tpu.dimension_semantics<parallel>], iteration_bounds = array<i64: 1>, scalar_prefetch = 0 : i64, scratch_operands = 0 : i64, tpu.core_type = #tpu.core_type<tc>, window_params = [{transform_indices = @transform_0, window_bounds = array<i64: 128, 128>}, {pipeline_mode = #tpu.pipeline_mode<synchronous>, transform_indices = @transform_1, window_bounds = array<i64: 128, 128>}, {transform_indices = @transform_2, window_bounds = array<i64: 128, 128>}]} {
    %c0 = arith.constant 0 : index
    %c0_0 = arith.constant 0 : index
    %0 = vector.load %arg1[%c0, %c0_0] : memref<128x128xf32, #tpu.memory_space<vmem>>, vector<128x128xf32>
    %c0_1 = arith.constant 0 : index
    %c0_2 = arith.constant 0 : index
    %1 = vector.load %arg2[%c0_1, %c0_2] : memref<128x128xf32, #tpu.memory_space<vmem>>, vector<128x128xf32>
    %cst = arith.constant dense<0.000000e+00> : vector<128x128xf32>
    %2 = tpu.matmul %0, %1, %cst {dimension_numbers = #tpu.dot_dimension_numbers<[1], [0], [0], [1], [0, 0, 1, 1], [], []>} : vector<128x128xf32>, vector<128x128xf32>, vector<128x128xf32> -> vector<128x128xf32>
    %3 = arith.truncf %2 : vector<128x128xf32> to vector<128x128xbf16>
    %c0_3 = arith.constant 0 : index
    %c0_4 = arith.constant 0 : index
    %4 = vector.load %arg3[%c0_3, %c0_4] : memref<128x128xbf16, #tpu.memory_space<vmem>>, vector<128x128xbf16>
    tpu.vector_store %arg3[%c0_3, %c0_4], %3 {strides = array<i32>} : memref<128x128xbf16, #tpu.memory_space<vmem>>, vector<128x128xbf16>,
    return
  }
  func.func @transform_0(%arg0: i32) -> (i32, i32) {
    %c0_i32 = arith.constant 0 : i32
    %c0_i32_0 = arith.constant 0 : i32
    return %arg0, %c0_i32 : i32, i32
  }
  func.func @transform_1(%arg0: i32) -> (i32, i32) {
    %c0_i32 = arith.constant 0 : i32
    %c0_i32_0 = arith.constant 0 : i32
    %c0_i32_1 = arith.constant 0 : i32
    return %c0_i32, %c0_i32_0 : i32, i32
  }
  func.func @transform_2(%arg0: i32) -> (i32, i32) {
    %c0_i32 = arith.constant 0 : i32
    %c0_i32_0 = arith.constant 0 : i32
    return %arg0, %c0_i32 : i32, i32
  }
}

</mosaic_0001>

<llo_original>
// kernel: tpu_custom_call.1
$region0: #{tpu_custom_call.1}
  #allocation0 [shape = 'u32[]', space=smem, size = 0x4, offset = 0x4, fixed_abs, tag = 'smem constant byte address 0x4 - core index']
  #allocation1 [shape = 'u32[144,128]{1,0:T(1,128)}', space=vmem, size = 0x12000, scoped, tag = 'internal scratch']
  %s0 = inlined_call_operand.hbm [shape: f32[128,128], index: 0, kind: input, shape index: {}]
  %s1 = inlined_call_operand.hbm [shape: f32[128,128], index: 1, kind: input, shape index: {}]
  %s2 = inlined_call_operand.hbm [shape: bf16[128,128], index: 2, kind: output, shape index: {}]
  %s3 = sld [smem:[#allocation0]]
  $region26: #{tpu_custom_call.1} parent=0
    _
  %s5 = ssub.s32 1, %s3
  %s6 = scalar_select 0, %s5, %s3
  $region1: #{tpu_custom_call.1} parent=0
    #allocation2 [shape = 'u8[65536]{0}', space=vmem, size = 0x10000, scoped, tag = 'input window, operand 0, single buffered']
    #allocation3 [shape = 's32[1]{0}', space=sflag, size = 0x4, scoped, tag = 'scoped memory for tpu_custom_call.1']
    #allocation4 [shape = 's32[1]{0}', space=sflag, size = 0x4, scoped, tag = 'scoped memory for tpu_custom_call.1']
    #allocation5 [shape = 'u8[65536]{0}', space=vmem, size = 0x10000, scoped, tag = 'input window, operand 1, single buffered']
    #allocation6 [shape = 's32[1]{0}', space=sflag, size = 0x4, scoped, tag = 'scoped memory for tpu_custom_call.1']
    #allocation7 [shape = 'u8[32768]{0}', space=vmem, size = 0x8000, scoped, tag = 'output window, operand 0, single buffered']
    %7 = vsyncpa [#allocation3], 0
    %8 = vsyncpa [#allocation6], 0
    %9 = vsyncpa [#allocation4], 0
    // Predicated region
    $region2: #{tpu_custom_call.1} parent=1 // pred_check
      _
    $region3: #{tpu_custom_call.1} parent=1 // pred_check_branch
      %11 = sbr.rel (0) target = $region5
    $region4: #{tpu_custom_call.1} parent=1 // pred_region
      %s13 = ssub.s32 2048, 2048
      %14 = vsyncadd [#allocation3], %s13
      %s15 = sshll.u32 [#allocation2], 4
      %s16 = int_to_ptr.vmem [resolvable:$true] %s15
      %21 = dma.hbm_to_vmem [thread:$0]  %s0, 2048, %s16, [#allocation3], 128, 128, 8
    $region5: #{tpu_custom_call.1} parent=1 // pred_fallthru
      _
    // Predicated region
    $region6: #{tpu_custom_call.1} parent=1 // pred_check
      _
    $region7: #{tpu_custom_call.1} parent=1 // pred_check_branch
      %23 = sbr.rel (0) target = $region9
    $region8: #{tpu_custom_call.1} parent=1 // pred_region
      %s25 = ssub.s32 2048, 2048
      %26 = vsyncadd [#allocation6], %s25
      %s27 = sshll.u32 [#allocation5], 4
      %s28 = int_to_ptr.vmem [resolvable:$true] %s27
      %33 = dma.hbm_to_vmem [thread:$0]  %s1, 2048, %s28, [#allocation6], 128, 128, 8
    $region9: #{tpu_custom_call.1} parent=1 // pred_fallthru
      _
    // Predicated region
    $region10: #{tpu_custom_call.1} parent=1 // pred_check
      _
    $region11: #{tpu_custom_call.1} parent=1 // pred_check_branch
      %35 = sbr.rel (0) target = $region13
    $region12: #{tpu_custom_call.1} parent=1 // pred_region
      %36 = dma.done [#allocation3], 2048
    $region13: #{tpu_custom_call.1} parent=1 // pred_fallthru
      _
    // Predicated region
    $region14: #{tpu_custom_call.1} parent=1 // pred_check
      _
    $region15: #{tpu_custom_call.1} parent=1 // pred_check_branch
      %38 = sbr.rel (0) target = $region17
    $region16: #{tpu_custom_call.1} parent=1 // pred_region
      %39 = dma.done [#allocation6], 2048
    $region17: #{tpu_custom_call.1} parent=1 // pred_fallthru
      _
    %v40 = vld [vmem:[#allocation2] sm:$0xff]
    %v41 = vld [vmem:[#allocation2 + $0x8] sm:$0xff]
    %v42 = vld [vmem:[#allocation2 + $0x10] sm:$0xff]
    %v43 = vld [vmem:[#allocation2 + $0x18] sm:$0xff]
    %v44 = vld [vmem:[#allocation2 + $0x20] sm:$0xff]
    %v45 = vld [vmem:[#allocation2 + $0x28] sm:$0xff]
    %v46 = vld [vmem:[#allocation2 + $0x30] sm:$0xff]
    %v47 = vld [vmem:[#allocation2 + $0x38] sm:$0xff]
    %v48 = vld [vmem:[#allocation2 + $0x40] sm:$0xff]
    %v49 = vld [vmem:[#allocation2 + $0x48] sm:$0xff]
    %v50 = vld [vmem:[#allocation2 + $0x50] sm:$0xff]
    %v51 = vld [vmem:[#allocation2 + $0x58] sm:$0xff]
    %v52 = vld [vmem:[#allocation2 + $0x60] sm:$0xff]
    %v53 = vld [vmem:[#allocation2 + $0x68] sm:$0xff]
    %v54 = vld [vmem:[#allocation2 + $0x70] sm:$0xff]
    %v55 = vld [vmem:[#allocation2 + $0x78] sm:$0xff]
    %v56 = vld [vmem:[#allocation5] sm:$0xff]
    %v57 = vld [vmem:[#allocation5 + $0x8] sm:$0xff]
    %v58 = vld [vmem:[#allocation5 + $0x10] sm:$0xff]
    %v59 = vld [vmem:[#allocation5 + $0x18] sm:$0xff]
    %v60 = vld [vmem:[#allocation5 + $0x20] sm:$0xff]
    %v61 = vld [vmem:[#allocation5 + $0x28] sm:$0xff]
    %v62 = vld [vmem:[#allocation5 + $0x30] sm:$0xff]
    %v63 = vld [vmem:[#allocation5 + $0x38] sm:$0xff]
    %v64 = vld [vmem:[#allocation5 + $0x40] sm:$0xff]
    %v65 = vld [vmem:[#allocation5 + $0x48] sm:$0xff]
    %v66 = vld [vmem:[#allocation5 + $0x50] sm:$0xff]
    %v67 = vld [vmem:[#allocation5 + $0x58] sm:$0xff]
    %v68 = vld [vmem:[#allocation5 + $0x60] sm:$0xff]
    %v69 = vld [vmem:[#allocation5 + $0x68] sm:$0xff]
    %v70 = vld [vmem:[#allocation5 + $0x70] sm:$0xff]
    %v71 = vld [vmem:[#allocation5 + $0x78] sm:$0xff]
    %72 = vmatprep.subr.mxu0 0.0
    %73 = vmatpush1.msra.mxu0 %v56
    %74 = vmatprep.subr.mxu0 0.0
    %75 = vmatpush1.msra.mxu0 %v57
    %76 = vmatprep.subr.mxu0 0.0
    %77 = vmatpush1.msra.mxu0 %v58
    %78 = vmatprep.subr.mxu0 0.0
    %79 = vmatpush1.msra.mxu0 %v59
    %80 = vmatprep.subr.mxu0 0.0
    %81 = vmatpush1.msra.mxu0 %v60
    %82 = vmatprep.subr.mxu0 0.0
    %83 = vmatpush1.msra.mxu0 %v61
    %84 = vmatprep.subr.mxu0 0.0
    %85 = vmatpush1.msra.mxu0 %v62
    %86 = vmatprep.subr.mxu0 0.0
    %87 = vmatpush1.msra.mxu0 %v63
    %88 = vmatprep.subr.mxu0 0.0
    %89 = vmatpush1.msra.mxu0 %v64
    %90 = vmatprep.subr.mxu0 0.0
    %91 = vmatpush1.msra.mxu0 %v65
    %92 = vmatprep.subr.mxu0 0.0
    %93 = vmatpush1.msra.mxu0 %v66
    %94 = vmatprep.subr.mxu0 0.0
    %95 = vmatpush1.msra.mxu0 %v67
    %96 = vmatprep.subr.mxu0 0.0
    %97 = vmatpush1.msra.mxu0 %v68
    %98 = vmatprep.subr.mxu0 0.0
    %99 = vmatpush1.msra.mxu0 %v69
    %100 = vmatprep.subr.mxu0 0.0
    %101 = vmatpush1.msra.mxu0 %v70
    %102 = vmatprep.subr.mxu0 0.0
    %103 = vmatpush1.msra.mxu0 %v71
    %104 = vmatprep.subr.mxu0 0.0
    %105 = vmatpush1.msra.mxu0 0.0
    %106 = vmatprep.subr.mxu0 0.0
    %107 = vmatpush1.msra.mxu0 0.0
    %108 = vmatprep.subr.mxu0 0.0
    %109 = vmatpush1.msra.mxu0 0.0
    %110 = vmatprep.subr.mxu0 0.0
    %111 = vmatpush1.msra.mxu0 0.0
    %112 = vmatprep.subr.mxu0 0.0
    %113 = vmatpush1.msra.mxu0 0.0
    %114 = vmatprep.subr.mxu0 0.0
    %115 = vmatpush1.msra.mxu0 0.0
    %116 = vmatprep.subr.mxu0 0.0
    %117 = vmatpush1.msra.mxu0 0.0
    %118 = vmatprep.subr.mxu0 0.0
    %119 = vmatpush1.msra.mxu0 0.0
    %120 = vmatprep.subr.mxu0 0.0
    %121 = vmatpush1.msra.mxu0 0.0
    %122 = vmatprep.subr.mxu0 0.0
    %123 = vmatpush1.msra.mxu0 0.0
    %124 = vmatprep.subr.mxu0 0.0
    %125 = vmatpush1.msra.mxu0 0.0
    %126 = vmatprep.subr.mxu0 0.0
    %127 = vmatpush1.msra.mxu0 0.0
    %128 = vmatprep.subr.mxu0 0.0
    %129 = vmatpush1.msra.mxu0 0.0
    %130 = vmatprep.subr.mxu0 0.0
    %131 = vmatpush1.msra.mxu0 0.0
    %132 = vmatprep.subr.mxu0 0.0
    %133 = vmatpush1.msra.mxu0 0.0
    %134 = vmatprep.subr.mxu0 0.0
    %135 = vmatpush1.msra.mxu0 0.0
    %136 = vmatprep.mubr.f32.mxu0 0.0
    %137 = vmatmul.mubr.f32.gmra.mrb[0].mxu0 %v40
    %v138 = vpop.f32.mrb[0].mxu0
    %v139 = vadd.f32 0.0, %v138
    %v140 = vpop.f32.mrb[0].mxu0
    %141 = vmatprep.mubr.f32.mxu0 0.0
    %142 = vmatmul.mubr.f32.gmra.mrb[0].mxu0 %v41
    %v143 = vpop.f32.mrb[0].mxu0
    %v144 = vadd.f32 0.0, %v143
    %v145 = vpop.f32.mrb[0].mxu0
    %146 = vmatprep.mubr.f32.mxu0 0.0
    %147 = vmatmul.mubr.f32.gmra.mrb[0].mxu0 %v42
    %v148 = vpop.f32.mrb[0].mxu0
    %v149 = vadd.f32 0.0, %v148
    %v150 = vpop.f32.mrb[0].mxu0
    %151 = vmatprep.mubr.f32.mxu0 0.0
    %152 = vmatmul.mubr.f32.gmra.mrb[0].mxu0 %v43
    %v153 = vpop.f32.mrb[0].mxu0
    %v154 = vadd.f32 0.0, %v153
    %v155 = vpop.f32.mrb[0].mxu0
    %156 = vmatprep.mubr.f32.mxu0 0.0
    %157 = vmatmul.mubr.f32.gmra.mrb[0].mxu0 %v44
    %v158 = vpop.f32.mrb[0].mxu0
    %v159 = vadd.f32 0.0, %v158
    %v160 = vpop.f32.mrb[0].mxu0
    %161 = vmatprep.mubr.f32.mxu0 0.0
    %162 = vmatmul.mubr.f32.gmra.mrb[0].mxu0 %v45
    %v163 = vpop.f32.mrb[0].mxu0
    %v164 = vadd.f32 0.0, %v163
    %v165 = vpop.f32.mrb[0].mxu0
    %166 = vmatprep.mubr.f32.mxu0 0.0
    %167 = vmatmul.mubr.f32.gmra.mrb[0].mxu0 %v46
    %v168 = vpop.f32.mrb[0].mxu0
    %v169 = vadd.f32 0.0, %v168
    %v170 = vpop.f32.mrb[0].mxu0
    %171 = vmatprep.mubr.f32.mxu0 0.0
    %172 = vmatmul.mubr.f32.gmra.mrb[0].mxu0 %v47
    %v173 = vpop.f32.mrb[0].mxu0
    %v174 = vadd.f32 0.0, %v173
    %v175 = vpop.f32.mrb[0].mxu0
    %176 = vmatprep.mubr.f32.mxu0 0.0
    %177 = vmatmul.mubr.f32.gmra.mrb[0].mxu0 %v48
    %v178 = vpop.f32.mrb[0].mxu0
    %v179 = vadd.f32 0.0, %v178
    %v180 = vpop.f32.mrb[0].mxu0
    %181 = vmatprep.mubr.f32.mxu0 0.0
    %182 = vmatmul.mubr.f32.gmra.mrb[0].mxu0 %v49
    %v183 = vpop.f32.mrb[0].mxu0
    %v184 = vadd.f32 0.0, %v183
    %v185 = vpop.f32.mrb[0].mxu0
    %186 = vmatprep.mubr.f32.mxu0 0.0
    %187 = vmatmul.mubr.f32.gmra.mrb[0].mxu0 %v50
    %v188 = vpop.f32.mrb[0].mxu0
    %v189 = vadd.f32 0.0, %v188
    %v190 = vpop.f32.mrb[0].mxu0
    %191 = vmatprep.mubr.f32.mxu0 0.0
    %192 = vmatmul.mubr.f32.gmra.mrb[0].mxu0 %v51
    %v193 = vpop.f32.mrb[0].mxu0
    %v194 = vadd.f32 0.0, %v193
    %v195 = vpop.f32.mrb[0].mxu0
    %196 = vmatprep.mubr.f32.mxu0 0.0
    %197 = vmatmul.mubr.f32.gmra.mrb[0].mxu0 %v52
    %v198 = vpop.f32.mrb[0].mxu0
    %v199 = vadd.f32 0.0, %v198
    %v200 = vpop.f32.mrb[0].mxu0
    %201 = vmatprep.mubr.f32.mxu0 0.0
    %202 = vmatmul.mubr.f32.gmra.mrb[0].mxu0 %v53
    %v203 = vpop.f32.mrb[0].mxu0
    %v204 = vadd.f32 0.0, %v203
    %v205 = vpop.f32.mrb[0].mxu0
    %206 = vmatprep.mubr.f32.mxu0 0.0
    %207 = vmatmul.mubr.f32.gmra.mrb[0].mxu0 %v54
    %v208 = vpop.f32.mrb[0].mxu0
    %v209 = vadd.f32 0.0, %v208
    %v210 = vpop.f32.mrb[0].mxu0
    %211 = vmatprep.mubr.f32.mxu0 0.0
    %212 = vmatmul.mubr.f32.gmra.mrb[0].mxu0 %v55
    %v213 = vpop.f32.mrb[0].mxu0
    %v214 = vadd.f32 0.0, %v213
    %v215 = vpop.f32.mrb[0].mxu0
    %216 = vdwg.mxu0
    %v217 = vpack.c.bf16 %v144, %v139
    %v218 = vpack.c.bf16 %v154, %v149
    %v219 = vpack.c.bf16 %v164, %v159
    %v220 = vpack.c.bf16 %v174, %v169
    %v221 = vpack.c.bf16 %v184, %v179
    %v222 = vpack.c.bf16 %v194, %v189
    %v223 = vpack.c.bf16 %v204, %v199
    %v224 = vpack.c.bf16 %v214, %v209
    %v233 = vunpack.c.l.b16 %v217
    %v234 = vunpack.c.h.b16 %v217
    %v235 = vunpack.c.l.b16 %v218
    %v236 = vunpack.c.h.b16 %v218
    %v237 = vunpack.c.l.b16 %v219
    %v238 = vunpack.c.h.b16 %v219
    %v239 = vunpack.c.l.b16 %v220
    %v240 = vunpack.c.h.b16 %v220
    %v241 = vunpack.c.l.b16 %v221
    %v242 = vunpack.c.h.b16 %v221
    %v243 = vunpack.c.l.b16 %v222
    %v244 = vunpack.c.h.b16 %v222
    %v245 = vunpack.c.l.b16 %v223
    %v246 = vunpack.c.h.b16 %v223
    %v247 = vunpack.c.l.b16 %v224
    %v248 = vunpack.c.h.b16 %v224
    %v249 = vpack.c.b16 %v233, %v233
    %v250 = vpack.c.b16 %v234, %v234
    %v251 = vpack.c.b16 %v235, %v235
    %v252 = vpack.c.b16 %v236, %v236
    %v253 = vpack.c.b16 %v237, %v237
    %v254 = vpack.c.b16 %v238, %v238
    %v255 = vpack.c.b16 %v239, %v239
    %v256 = vpack.c.b16 %v240, %v240
    %v257 = vpack.c.b16 %v241, %v241
    %v258 = vpack.c.b16 %v242, %v242
    %v259 = vpack.c.b16 %v243, %v243
    %v260 = vpack.c.b16 %v244, %v244
    %v261 = vpack.c.b16 %v245, %v245
    %v262 = vpack.c.b16 %v246, %v246
    %v263 = vpack.c.b16 %v247, %v247
    %v264 = vpack.c.b16 %v248, %v248
    %281 = vst [vmem:[#allocation7] sm:$0xf] %v249
    %282 = vst [vmem:[#allocation7 + $0x4] sm:$0xf] %v250
    %283 = vst [vmem:[#allocation7 + $0x8] sm:$0xf] %v251
    %284 = vst [vmem:[#allocation7 + $0xc] sm:$0xf] %v252
    %285 = vst [vmem:[#allocation7 + $0x10] sm:$0xf] %v253
    %286 = vst [vmem:[#allocation7 + $0x14] sm:$0xf] %v254
    %287 = vst [vmem:[#allocation7 + $0x18] sm:$0xf] %v255
    %288 = vst [vmem:[#allocation7 + $0x1c] sm:$0xf] %v256
    %289 = vst [vmem:[#allocation7 + $0x20] sm:$0xf] %v257
    %290 = vst [vmem:[#allocation7 + $0x24] sm:$0xf] %v258
    %291 = vst [vmem:[#allocation7 + $0x28] sm:$0xf] %v259
    %292 = vst [vmem:[#allocation7 + $0x2c] sm:$0xf] %v260
    %293 = vst [vmem:[#allocation7 + $0x30] sm:$0xf] %v261
    %294 = vst [vmem:[#allocation7 + $0x34] sm:$0xf] %v262
    %295 = vst [vmem:[#allocation7 + $0x38] sm:$0xf] %v263
    %296 = vst [vmem:[#allocation7 + $0x3c] sm:$0xf] %v264
    // Predicated region
    $region18: #{tpu_custom_call.1} parent=1 // pred_check
      _
    $region19: #{tpu_custom_call.1} parent=1 // pred_check_branch
      %298 = sbr.rel (0) target = $region21
    $region20: #{tpu_custom_call.1} parent=1 // pred_region
      %s300 = ssub.s32 1024, 1024
      %301 = vsyncadd [#allocation4], %s300
      %s302 = sshll.u32 [#allocation7], 4
      %s303 = int_to_ptr.vmem [resolvable:$true] %s302
      %308 = dma.vmem_to_hbm [thread:$0]  %s303, 1024, %s2, [#allocation4], 64, 64, 4
    $region21: #{tpu_custom_call.1} parent=1 // pred_fallthru
      _
    // Predicated region
    $region22: #{tpu_custom_call.1} parent=1 // pred_check
      _
    $region23: #{tpu_custom_call.1} parent=1 // pred_check_branch
      %310 = sbr.rel (0) target = $region25
    $region24: #{tpu_custom_call.1} parent=1 // pred_region
      %311 = dma.done [#allocation4], 1024
    $region25: #{tpu_custom_call.1} parent=1 // pred_fallthru
      _
    %312 = vsyncpa [#allocation3], 1
    %313 = vsyncpa [#allocation6], 1
    %314 = vsyncpa [#allocation4], 1

</llo_original>
